<compile_context>
chip_gen: v6e
topology: v6e:2x2x1
jax: 0.10.0
libtpu: 0.0.40
codegen_flags: <defaults>
</compile_context>

<pallas_src>
import jax
import jax.numpy as jnp
from jax.experimental import pallas as pl
from jax.experimental.pallas import tpu as pltpu

EPS = 1e-10  # matches PyTorch module's self.eps


def _l2norm_kernel(x_ref, w_ref, o_ref):
    # x_ref / o_ref: (1, C, Sb) with spatial positions on the lane axis.
    # w_ref: (C, 1) float32 (pre-cast in the wrapper).
    x = x_ref[...].astype(jnp.float32)
    # Channel reduction (sublane axis) -> per-spatial-column squared norm.
    s = jnp.sum(x * x, axis=1, keepdims=True)                 # (1, 1, Sb)
    # eps added AFTER sqrt, exactly like the PyTorch reference.
    # approx=False keeps full f32 accuracy (the reciprocal is only Sb wide,
    # so it is cheap either way).
    inv = pl.reciprocal(jnp.sqrt(s) + EPS)                    # (1, 1, Sb)
    w = w_ref[...][None]                                      # (1, C, 1)
    o_ref[...] = ((x * inv) * w).astype(o_ref.dtype)


def l2norm(x_nchw, weight, *, target_block_bytes=1 << 20):
    """x_nchw: (N, C, H, W); weight: (C,). Returns (N, C, H, W)."""
    N, C, H, W = x_nchw.shape
    S = H * W

    # Natural layout: just a reshape (contiguous), no transpose passes.
    x3d = x_nchw.reshape(N, C, S)
    w2d = weight.astype(jnp.float32).reshape(C, 1)

    # Lane-dense spatial tile: multiple of 128, sized by bytes (~1 MiB per
    # input block) so per-step pipeline overhead is amortized and double
    # buffered in+out blocks stay well under v5e's 16 MiB scoped VMEM.
    itemsize = jnp.dtype(x_nchw.dtype).itemsize
    bytes_per_col = C * itemsize
    sb = (target_block_bytes // (bytes_per_col * 128)) * 128
    sb = max(sb, 128)
    s_lane_aligned = pl.cdiv(S, 128) * 128
    sb = min(sb, s_lane_aligned)

    grid = (N, pl.cdiv(S, sb))  # Pallas masks the (possibly) partial last block

    out3d = pl.pallas_call(
        _l2norm_kernel,
        out_shape=jax.ShapeDtypeStruct((N, C, S), x_nchw.dtype),
        grid_spec=pltpu.PrefetchScalarGridSpec(
            num_scalar_prefetch=0,
            grid=grid,
            in_specs=[
                pl.BlockSpec((1, C, sb), lambda n, j: (n, 0, j)),
                pl.BlockSpec((C, 1), lambda n, j: (0, 0)),
            ],
            out_specs=pl.BlockSpec((1, C, sb), lambda n, j: (n, 0, j)),
        ),
        compiler_params=pltpu.CompilerParams(
            dimension_semantics=("parallel", "parallel"),
            vmem_limit_bytes=32 * 1024 * 1024,  # safe on v5e/v6e/v7x
        ),
    )(x3d, w2d)

    return out3d.reshape(N, C, H, W)


def l2norm_ref(x, weight):
    norm = jnp.sqrt(jnp.sum(x * x, axis=1, keepdims=True)) + EPS
    return weight[None, :, None, None] * (x / norm)


if __name__ == "__main__":
    key = jax.random.PRNGKey(0)

    # Small NCHW feature map consistent with the module's forward.
    N, C, H, W = 2, 8, 16, 16
    x = jax.random.normal(key, (N, C, H, W), dtype=jnp.float32)

    # nn.init.constant_(weight, gamma), gamma = 20 (typical SSD L2Norm scale).
    gamma = 20.0
    weight = jnp.full((C,), gamma, dtype=jnp.float32)

    out = l2norm(x, weight)
    out = jax.block_until_ready(out)

    ref = l2norm_ref(x, weight)
    assert out.shape == (N, C, H, W)
    assert jnp.allclose(out, ref, atol=1e-5, rtol=1e-5)

    print("KERNEL_OK")
</pallas_src>

<mosaic_0001>
module attributes {stable_mosaic.version = 11 : i64} {
  func.func @_l2norm_kernel(%arg0: i32, %arg1: i32, %arg2: memref<1x8x256xf32, #tpu.memory_space<vmem>>, %arg3: memref<8x1xf32, #tpu.memory_space<vmem>>, %arg4: memref<1x8x256xf32, #tpu.memory_space<vmem>>) attributes {dimension_semantics = [#tpu.dimension_semantics<parallel>, #tpu.dimension_semantics<parallel>], iteration_bounds = array<i64: 2, 1>, scalar_prefetch = 0 : i64, scratch_operands = 0 : i64, tpu.core_type = #tpu.core_type<tc>, window_params = [{transform_indices = @transform_0, window_bounds = array<i64: 1, 8, 256>}, {pipeline_mode = #tpu.pipeline_mode<synchronous>, transform_indices = @transform_1, window_bounds = array<i64: 8, 1>}, {transform_indices = @transform_2, window_bounds = array<i64: 1, 8, 256>}]} {
    %c0 = arith.constant 0 : index
    %c0_0 = arith.constant 0 : index
    %c0_1 = arith.constant 0 : index
    %0 = vector.load %arg2[%c0, %c0_0, %c0_1] : memref<1x8x256xf32, #tpu.memory_space<vmem>>, vector<1x8x256xf32>
    %1 = arith.mulf %0, %0 : vector<1x8x256xf32>
    %cst = arith.constant dense<0.000000e+00> : vector<1x256xf32>
    %2 = vector.multi_reduction <add>, %1, %cst [1] : vector<1x8x256xf32> to vector<1x256xf32>
    %3 = vector.shape_cast %2 : vector<1x256xf32> to vector<1x1x256xf32>
    %4 = math.sqrt %3 : vector<1x1x256xf32>
    %cst_2 = arith.constant 1.000000e-10 : f32
    %5 = vector.broadcast %cst_2 : f32 to vector<1x1x256xf32>
    %6 = arith.addf %4, %5 : vector<1x1x256xf32>
    %7 = tpu.reciprocal %6 : vector<1x1x256xf32> -> vector<1x1x256xf32>
    %c0_3 = arith.constant 0 : index
    %c0_4 = arith.constant 0 : index
    %8 = vector.load %arg3[%c0_3, %c0_4] : memref<8x1xf32, #tpu.memory_space<vmem>>, vector<8x1xf32>
    %9 = vector.shape_cast %8 : vector<8x1xf32> to vector<1x8x1xf32>
    %10 = vector.broadcast %7 : vector<1x1x256xf32> to vector<1x8x256xf32>
    %11 = arith.mulf %0, %10 : vector<1x8x256xf32>
    %12 = vector.broadcast %9 : vector<1x8x1xf32> to vector<1x8x256xf32>
    %13 = arith.mulf %11, %12 : vector<1x8x256xf32>
    %c0_5 = arith.constant 0 : index
    %c0_6 = arith.constant 0 : index
    %c0_7 = arith.constant 0 : index
    %14 = vector.load %arg4[%c0_5, %c0_6, %c0_7] : memref<1x8x256xf32, #tpu.memory_space<vmem>>, vector<1x8x256xf32>
    tpu.vector_store %arg4[%c0_5, %c0_6, %c0_7], %13 {strides = array<i32>} : memref<1x8x256xf32, #tpu.memory_space<vmem>>, vector<1x8x256xf32>,
    return
  }
  func.func @transform_0(%arg0: i32, %arg1: i32) -> (i32, i32, i32) {
    %c0_i32 = arith.constant 0 : i32
    %c0_i32_0 = arith.constant 0 : i32
    return %arg0, %c0_i32, %arg1 : i32, i32, i32
  }
  func.func @transform_1(%arg0: i32, %arg1: i32) -> (i32, i32) {
    %c0_i32 = arith.constant 0 : i32
    %c0_i32_0 = arith.constant 0 : i32
    %c0_i32_1 = arith.constant 0 : i32
    return %c0_i32, %c0_i32_0 : i32, i32
  }
  func.func @transform_2(%arg0: i32, %arg1: i32) -> (i32, i32, i32) {
    %c0_i32 = arith.constant 0 : i32
    %c0_i32_0 = arith.constant 0 : i32
    return %arg0, %c0_i32, %arg1 : i32, i32, i32
  }
}

</mosaic_0001>

<llo_original>
// kernel: tpu_custom_call.1
$region0: #{tpu_custom_call.1}
  #allocation0 [shape = 'u32[]', space=smem, size = 0x4, offset = 0x4, fixed_abs, tag = 'smem constant byte address 0x4 - core index']
  #allocation1 [shape = 'u32[144,128]{1,0:T(1,128)}', space=vmem, size = 0x12000, scoped, tag = 'internal scratch']
  %s0 = inlined_call_operand.hbm [shape: f32[2,8,256], index: 0, kind: input, shape index: {}]
  %s1 = inlined_call_operand.vmem [shape: f32[8,1], index: 1, kind: input, shape index: {}]
  %s2 = inlined_call_operand.hbm [shape: f32[2,8,256], index: 2, kind: output, shape index: {}]
  %s3 = sld [smem:[#allocation0]]
  $region45: #{tpu_custom_call.1} parent=0
    _
  %s5 = ssub.s32 1, %s3
  %s6 = scalar_select 0, %s5, %s3
  $region1: #{tpu_custom_call.1} parent=0
    #allocation2 [shape = 'u8[16384]{0}', space=vmem, size = 0x4000, scoped, tag = 'input window, operand 0']
    #allocation3 [shape = 's32[2]{0}', space=sflag, size = 0x8, scoped, tag = 'scoped memory for tpu_custom_call.1']
    #allocation4 [shape = 's32[2]{0}', space=sflag, size = 0x8, scoped, tag = 'scoped memory for tpu_custom_call.1']
    #allocation5 [shape = 'u8[16384]{0}', space=vmem, size = 0x4000, scoped, tag = 'output window, operand 0']
    %7 = vsyncpa [#allocation3], 0
    %s8 = scalar_lea.sflag [#allocation3], 1
    %9 = vsyncpa %s8, 0
    %10 = vsyncpa [#allocation4], 0
    %s11 = scalar_lea.sflag [#allocation4], 1
    %12 = vsyncpa %s11, 0
    loop: start=0, step=1, limit=4
    $region2: #{tpu_custom_call.1} parent=1 // loop_pre_header
      _
    $region3: #{tpu_custom_call.1} parent=1 // loop_header
      %s14 = sphi 0, %s18
      %p15 = scmp.ge.s32.totalorder %s14, 4
      %s21 = sphi 0, %s33
      %s22 = sphi 0, %s29
      %s23 = sphi 0, %s21
      %s24 = sphi 0, %s22
      %s25 = sphi 0, %s23
      %s26 = sphi 0, %s24
      %s38 = sphi 0, %s40
      %s41 = sphi 0, %s38
      %s42 = sphi 0, %s41
      %s58 = sphi 0, %s42
      %s62 = sphi 0, %s62
      %s64 = sphi 0, %s62
      %s65 = sphi 0, %s64
      %s79 = sphi 0, %s65
      %s87 = sphi 0, %s89
      %s90 = sphi 0, %s87
      %s91 = sphi 0, %s90
      %s107 = sphi 0, %s91
    $region4: #{tpu_custom_call.1} parent=1 // loop_header_branch
      %17 = sbr.rel (%p15) target = $region8
    $region5: #{tpu_custom_call.1} parent=1 // loop_body
      %s19 = ssub.s32 %s14, 1
      %s20 = ssub.s32 %s14, 2
      %s27 = sadd.s32 1, %s22
      %p28 = scmp.ge.s32.totalorder %s27, 1
      %s29 = scalar_select %p28, 0, %s27
      %s30 = sadd.s32 1, %s21
      %s31 = scalar_select %p28, %s30, %s21
      %p32 = scmp.ge.s32.totalorder %s31, 2
      %s33 = scalar_select %p32, 0, %s31
      %s34 = ssub.s32 %s21, %s33
      %s35 = ssub.s32 %s22, %s29
      %s36 = sor.u32 %s34, %s35
      %p37 = scmp.eq.s32.totalorder %s36, 0
      %s39 = sadd.s32 %s38, 1
      %s40 = scalar_select %p37, %s38, %s39
      %p43 = pneg %p37
      %p44 = scmp.eq.s32.totalorder %s14, 1
      %p45 = por %p43, %p44
      %p46 = scmp.ne.s32.totalorder %s38, %s41
      %p47 = scmp.eq.s32.totalorder %s14, 0
      %p48 = por %p46, %p47
      %p49 = scmp.ne.s32.totalorder %s38, %s41
      %p50 = scmp.eq.s32.totalorder %s19, 1
      %p51 = por %p49, %p50
      %p52 = scmp.ne.s32.totalorder %s41, %s42
      %p53 = scmp.eq.s32.totalorder %s19, 0
      %p54 = por %p52, %p53
      %p55 = scmp.ne.s32.totalorder %s41, %s42
      %p56 = scmp.eq.s32.totalorder %s20, 1
      %p57 = por %p55, %p56
      %p59 = scmp.ne.s32.totalorder %s42, %s58
      %p60 = scmp.eq.s32.totalorder %s20, 0
      %p61 = por %p59, %p60
      %s63 = sadd.s32 %s62, 1
      %p66 = scmp.eq.s32.totalorder %s14, 1
      %p67 = scmp.ne.s32.totalorder %s62, %s64
      %p68 = scmp.eq.s32.totalorder %s14, 0
      %p69 = por %p67, %p68
      %p70 = scmp.ne.s32.totalorder %s62, %s64
      %p71 = scmp.eq.s32.totalorder %s19, 1
      %p72 = por %p70, %p71
      %p73 = scmp.ne.s32.totalorder %s64, %s65
      %p74 = scmp.eq.s32.totalorder %s19, 0
      %p75 = por %p73, %p74
      %p76 = scmp.ne.s32.totalorder %s64, %s65
      %p77 = scmp.eq.s32.totalorder %s20, 1
      %p78 = por %p76, %p77
      %p80 = scmp.ne.s32.totalorder %s65, %s79
      %p81 = scmp.eq.s32.totalorder %s20, 0
      %p82 = por %p80, %p81
      %s83 = ssub.s32 %s21, %s33
      %s84 = ssub.s32 %s22, %s29
      %s85 = sor.u32 %s83, %s84
      %p86 = scmp.eq.s32.totalorder %s85, 0
      %s88 = sadd.s32 %s87, 1
      %s89 = scalar_select %p86, %s87, %s88
      %p92 = pneg %p86
      %p93 = scmp.eq.s32.totalorder %s14, 1
      %p94 = por %p92, %p93
      %p95 = scmp.ne.s32.totalorder %s87, %s90
      %p96 = scmp.eq.s32.totalorder %s14, 0
      %p97 = por %p95, %p96
      %p98 = scmp.ne.s32.totalorder %s87, %s90
      %p99 = scmp.eq.s32.totalorder %s19, 1
      %p100 = por %p98, %p99
      %p101 = scmp.ne.s32.totalorder %s90, %s91
      %p102 = scmp.eq.s32.totalorder %s19, 0
      %p103 = por %p101, %p102
      %p104 = scmp.ne.s32.totalorder %s90, %s91
      %p105 = scmp.eq.s32.totalorder %s20, 1
      %p106 = por %p104, %p105
      %p108 = scmp.ne.s32.totalorder %s91, %s107
      %p109 = scmp.eq.s32.totalorder %s20, 0
      %p110 = por %p108, %p109
      %p111 = scmp.le.s32.totalorder 1, %s14
      %p112 = scmp.lt.s32.totalorder %s14, 3
      %p113 = pnand %p111, %p112
      %p114 = pneg %p113
      // Predicated region
      $region9: #{tpu_custom_call.1} parent=5 // pred_check
        _
      $region10: #{tpu_custom_call.1} parent=5 // pred_check_branch
        %116 = sbr.rel (%p113) target = $region12
      $region11: #{tpu_custom_call.1} parent=5 // pred_region
        %s117 = ssub.s32 %s14, 1
        // Predicated region
        $region13: #{tpu_custom_call.1} parent=11 // pred_check
          %p118 = pneg %p75
        $region14: #{tpu_custom_call.1} parent=11 // pred_check_branch
          %120 = sbr.rel (%p118) target = $region16
        $region15: #{tpu_custom_call.1} parent=11 // pred_region
          _
        $region16: #{tpu_custom_call.1} parent=11 // pred_fallthru
          _
      $region12: #{tpu_custom_call.1} parent=5 // pred_fallthru
        _
      %p121 = scmp.lt.s32.totalorder %s14, 2
      // Predicated region
      $region17: #{tpu_custom_call.1} parent=5 // pred_check
        %p122 = pneg %p121
      $region18: #{tpu_custom_call.1} parent=5 // pred_check_branch
        %124 = sbr.rel (%p122) target = $region20
      $region19: #{tpu_custom_call.1} parent=5 // pred_region
        // Predicated region
        $region21: #{tpu_custom_call.1} parent=19 // pred_check
          %p125 = pneg %p48
        $region22: #{tpu_custom_call.1} parent=19 // pred_check_branch
          %127 = sbr.rel (%p125) target = $region24
        $region23: #{tpu_custom_call.1} parent=19 // pred_region
          %s128 = sand.u32 %s38, 1
          %s129 = scalar_lea.sflag [#allocation3], %s128
          %s130 = sand.u32 %s38, 1
          %s131 = smul.addr %s130, 16
          %s132 = scalar_lea.vmem [#allocation2], %s131
          %s133 = smul.u32 2, %s22
          %s135 = ssub.s32 256, 256
          %136 = vsyncadd %s129, %s135
          %s137 = smul.addr %s21, 2
          %s138 = sadd.s32 %s133, %s137
          %s139 = smul.addr %s138, 128
          %s140 = scalar_lea.hbm %s0, %s139
          %s142 = sshll.u32 %s132, 4
          %s143 = int_to_ptr.vmem [resolvable:$true] %s142
          %145 = dma.hbm_to_vmem [thread:$0]  %s140, 256, %s143, %s129
        $region24: #{tpu_custom_call.1} parent=19 // pred_fallthru
          _
      $region20: #{tpu_custom_call.1} parent=5 // pred_fallthru
        _
      %p146 = scmp.le.s32.totalorder 1, %s14
      %p147 = scmp.lt.s32.totalorder %s14, 3
      %p148 = pnand %p146, %p147
      %p149 = pneg %p148
      // Predicated region
      $region25: #{tpu_custom_call.1} parent=5 // pred_check
        _
      $region26: #{tpu_custom_call.1} parent=5 // pred_check_branch
        %151 = sbr.rel (%p148) target = $region28
      $region27: #{tpu_custom_call.1} parent=5 // pred_region
        %s152 = ssub.s32 %s14, 1
        %s153 = sand.u32 %s41, 1
        %s154 = scalar_lea.sflag [#allocation3], %s153
        %s155 = sand.u32 %s41, 1
        %s156 = smul.addr %s155, 16
        %s157 = scalar_lea.vmem [#allocation2], %s156
        // Predicated region
        $region29: #{tpu_custom_call.1} parent=27 // pred_check
          %p158 = pneg %p54
        $region30: #{tpu_custom_call.1} parent=27 // pred_check_branch
          %160 = sbr.rel (%p158) target = $region32
        $region31: #{tpu_custom_call.1} parent=27 // pred_region
          %161 = dma.done %s154, 256
        $region32: #{tpu_custom_call.1} parent=27 // pred_fallthru
          _
        %s162 = sand.u32 %s41, 1
        %s163 = scalar_lea.sflag [#allocation3], %s162
        %s164 = sand.u32 %s41, 1
        %s165 = smul.addr %s164, 16
        %s166 = scalar_lea.vmem [#allocation2], %s165
        %p167 = pneg %p54
        %p168 = pneg %p51
        %p169 = pneg %p75
        %p170 = pneg %p72
        %p171 = pneg %p103
        %p172 = pneg %p100
        %s173 = sand.u32 %s90, 1
        %s174 = scalar_lea.sflag [#allocation4], %s173
        %s175 = sand.u32 %s90, 1
        %s176 = smul.addr %s175, 16
        %s177 = scalar_lea.vmem [#allocation5], %s176
        %s178 = smul.u32 2, %s24
        %s179 = smul.u32 2, %s24
        %v180 = vld [vmem:[%s157] sm:$0xff]
        %v181 = vld [vmem:[%s157 + $0x8] sm:$0xff]
        %v182 = vmul.f32 %v180, %v180
        %v183 = vmul.f32 %v181, %v181
        %v184 = vrot.slane %v182, 4
        %v185 = vadd.f32 %v182, %v184
        %v186 = vrot.slane %v185, 2
        %v187 = vadd.f32 %v185, %v186
        %v188 = vrot.slane %v187, 1
        %v189 = vadd.f32 %v187, %v188
        %v190 = vrot.slane %v183, 4
        %v191 = vadd.f32 %v183, %v190
        %v192 = vrot.slane %v191, 2
        %v193 = vadd.f32 %v191, %v192
        %v194 = vrot.slane %v193, 1
        %v195 = vadd.f32 %v193, %v194
        %v196 = vrsqrt.pop %v189
        %v197 = vmul.f32 %v189, %v196
        %vm198 = vcmp.eq.f32.partialorder %v189, inf
        %v199 = vsel %vm198, %v189, %v197
        %vm200 = vcmp.eq.f32.partialorder %v189, 0.0
        %v201 = vand.u32 %v189, 2147483648
        %v202 = vsel %vm200, %v201, %v199
        %v203 = vrsqrt.pop %v195
        %v204 = vmul.f32 %v195, %v203
        %vm205 = vcmp.eq.f32.partialorder %v195, inf
        %v206 = vsel %vm205, %v195, %v204
        %vm207 = vcmp.eq.f32.partialorder %v195, 0.0
        %v208 = vand.u32 %v195, 2147483648
        %v209 = vsel %vm207, %v208, %v206
        %v210 = vadd.f32 %v202, 1e-10
        %v211 = vadd.f32 %v209, 1e-10
        %v212 = vrcp.pop %v210
        %v213 = vrcp.pop %v211
        %v214 = vld [vmem:[%s1] sm:$0xff]
        %v215 = vmul.f32 %v180, %v212
        %v216 = vmul.f32 %v181, %v213
        %218 = vset.pattern.permute.xlu0 0
        %219 = vperm.xlu0 %218, %v214
        %v220 = vpop.permute.xlu0 %219
        %v222 = vmul.f32 %v215, %v220
        %v223 = vmul.f32 %v216, %v220
        %224 = vst [vmem:[%s177] sm:$0xff] %v222
        %225 = vst [vmem:[%s177 + $0x8] sm:$0xff] %v223
        %s226 = sand.u32 %s90, 1
        %s227 = scalar_lea.sflag [#allocation4], %s226
        %s228 = sand.u32 %s90, 1
        %s229 = smul.addr %s228, 16
        %s230 = scalar_lea.vmem [#allocation5], %s229
        // Predicated region
        $region33: #{tpu_custom_call.1} parent=27 // pred_check
          %p231 = pneg %p100
        $region34: #{tpu_custom_call.1} parent=27 // pred_check_branch
          %233 = sbr.rel (%p231) target = $region36
        $region35: #{tpu_custom_call.1} parent=27 // pred_region
          %s234 = smul.u32 2, %s24
          %s236 = ssub.s32 256, 256
          %237 = vsyncadd %s227, %s236
          %s238 = smul.addr %s23, 2
          %s239 = sadd.s32 %s234, %s238
          %s240 = smul.addr %s239, 128
          %s241 = scalar_lea.hbm %s2, %s240
          %s243 = sshll.u32 %s230, 4
          %s244 = int_to_ptr.vmem [resolvable:$true] %s243
          %246 = dma.vmem_to_hbm [thread:$0]  %s244, 256, %s241, %s227
        $region36: #{tpu_custom_call.1} parent=27 // pred_fallthru
          _
      $region28: #{tpu_custom_call.1} parent=5 // pred_fallthru
        _
      %p247 = scmp.le.s32.totalorder 2, %s14
      // Predicated region
      $region37: #{tpu_custom_call.1} parent=5 // pred_check
        %p248 = pneg %p247
      $region38: #{tpu_custom_call.1} parent=5 // pred_check_branch
        %250 = sbr.rel (%p248) target = $region40
      $region39: #{tpu_custom_call.1} parent=5 // pred_region
        %s251 = ssub.s32 %s14, 2
        // Predicated region
        $region41: #{tpu_custom_call.1} parent=39 // pred_check
          %p252 = pneg %p106
        $region42: #{tpu_custom_call.1} parent=39 // pred_check_branch
          %254 = sbr.rel (%p252) target = $region44
        $region43: #{tpu_custom_call.1} parent=39 // pred_region
          %s255 = sand.u32 %s91, 1
          %s256 = scalar_lea.sflag [#allocation4], %s255
          %s257 = sand.u32 %s91, 1
          %s258 = smul.addr %s257, 16
          %s259 = scalar_lea.vmem [#allocation5], %s258
          %260 = dma.done %s256, 256
        $region44: #{tpu_custom_call.1} parent=39 // pred_fallthru
          _
      $region40: #{tpu_custom_call.1} parent=5 // pred_fallthru
        _
    $region6: #{tpu_custom_call.1} parent=1 // loop_footer
      %s18 = sadd.s32 1, %s14
    $region7: #{tpu_custom_call.1} parent=1 // loop_footer_branch
      %13 = sbr.rel target = $region3
    $region8: #{tpu_custom_call.1} parent=1 // loop_exit
      _
    %261 = vsyncpa [#allocation3], 1
    %s262 = scalar_lea.sflag [#allocation3], 1
    %263 = vsyncpa %s262, 1
    %264 = vsyncpa [#allocation4], 1
    %s265 = scalar_lea.sflag [#allocation4], 1
    %266 = vsyncpa %s265, 1

</llo_original>
